<compile_context>
chip_gen: v6e
topology: v6e:2x2x1
jax: 0.10.0
libtpu: 0.0.40
codegen_flags: <defaults>
</compile_context>

<pallas_src>
import jax
import jax.numpy as jnp
from jax.experimental import pallas as pl
from jax.experimental.pallas import tpu as pltpu

BN_EPS = 1e-5
H1 = 128   # fc1 width
H2 = 256   # fc2 width


def _decoder_kernel(x_ref, w1_ref, w2_hbm, w3_hbm, p_ref, o_ref,
                    w2_buf, w3_buf, sems):
    f32 = jnp.float32
    bf16 = jnp.bfloat16

    # Kick off w2/w3 weight fetches immediately; they complete behind fc1+BN1.
    cp2 = pltpu.make_async_copy(w2_hbm, w2_buf, sems.at[0])
    cp3 = pltpu.make_async_copy(w3_hbm, w3_buf, sems.at[1])
    cp2.start()
    cp3.start()

    # ---- fc1 (bias omitted: cancelled by BN1's mean subtraction) ----
    h = jnp.dot(x_ref[...].astype(bf16), w1_ref[...], preferred_element_type=f32)

    # ---- BatchNorm1d(128) folded to one affine, then ReLU ----
    mean = jnp.mean(h, axis=0, keepdims=True)
    var = jnp.mean(h * h, axis=0, keepdims=True) - mean * mean     # biased (training BN)
    var = jnp.maximum(var, 0.0)                                    # guard cancellation
    gamma = p_ref[:, 0:H1]
    beta = p_ref[:, H1:2 * H1]
    scale = gamma * jax.lax.rsqrt(var + BN_EPS)
    h = jnp.maximum(h * scale + (beta - mean * scale), 0.0)

    # ---- fc2 (bias omitted) + BatchNorm1d(256) + ReLU ----
    cp2.wait()
    h = jnp.dot(h.astype(bf16), w2_buf[...], preferred_element_type=f32)
    mean = jnp.mean(h, axis=0, keepdims=True)
    var = jnp.mean(h * h, axis=0, keepdims=True) - mean * mean
    var = jnp.maximum(var, 0.0)
    off = 2 * H1
    gamma = p_ref[:, off:off + H2]
    beta = p_ref[:, off + H2:off + 2 * H2]
    scale = gamma * jax.lax.rsqrt(var + BN_EPS)
    h = jnp.maximum(h * scale + (beta - mean * scale), 0.0)

    # ---- fc3 (output padded to a 128-lane multiple for lane-dense stores) ----
    cp3.wait()
    out = jnp.dot(h.astype(bf16), w3_buf[...], preferred_element_type=f32)
    b3 = p_ref[:, 2 * H1 + 2 * H2:]
    o_ref[...] = out + b3


def _full_block(a):
    """Whole-array block; fixed-arity index_map (no late binding of loop vars)."""
    ndim = a.ndim
    return pl.BlockSpec(a.shape, lambda ndim=ndim: (0,) * ndim)


def _vmem_limit_bytes(B, input_size, out_pad):
    """Shape-derived VMEM request: activations + weights + params, with headroom."""
    act = 4 * B * (input_size + H1 + H2 + out_pad)              # f32 activations
    wts = 2 * (input_size * H1 + H1 * H2 + H2 * out_pad)        # bf16 weights
    par = 4 * (2 * H1 + 2 * H2 + out_pad)                       # packed BN/bias vector
    need = 2 * (act + wts + par) + (2 << 20)                    # buffering + headroom
    return int(min(max(need, 4 << 20), 64 << 20))               # stay within v7x VMEM


def decoder_forward(x, params, output_size):
    """x: (B, input_size) float32.  params: packed dict from init_decoder_params."""
    B, input_size = x.shape
    out_pad = params["w3"].shape[1]           # padded (multiple-of-128) fc3 width

    args = (x, params["w1"], params["w2"], params["w3"], params["p"])

    out_padded = pl.pallas_call(
        _decoder_kernel,
        grid=(),
        in_specs=[
            _full_block(x),
            _full_block(params["w1"]),
            pl.BlockSpec(memory_space=pl.ANY),   # w2: manual overlapped DMA
            pl.BlockSpec(memory_space=pl.ANY),   # w3: manual overlapped DMA
            _full_block(params["p"]),
        ],
        out_specs=pl.BlockSpec((B, out_pad), lambda: (0, 0)),
        out_shape=jax.ShapeDtypeStruct((B, out_pad), jnp.float32),
        scratch_shapes=[
            pltpu.VMEM((H1, H2), jnp.bfloat16),
            pltpu.VMEM((H2, out_pad), jnp.bfloat16),
            pltpu.SemaphoreType.DMA((2,)),
        ],
        compiler_params=pltpu.CompilerParams(
            vmem_limit_bytes=_vmem_limit_bytes(B, input_size, out_pad)),
    )(*args)

    if out_pad != output_size:
        out_padded = out_padded[:, :output_size]
    return out_padded


def init_decoder_params(key, input_size, output_size):
    """Mirror nn.Linear init (uniform +-1/sqrt(fan_in)) and nn.BatchNorm1d
    (gamma=1, beta=0).  Weights pre-transposed to (in, out) and stored as bf16.
    fc1/fc2 biases are not created: training-mode BN cancels them exactly.
    gamma/beta of both BN layers plus the (lane-padded) fc3 bias are packed into
    a single (1, 768 + out_pad) f32 vector 'p' -> one parameter DMA."""
    out_pad = ((output_size + 127) // 128) * 128

    def linear(k, fan_in, fan_out, with_bias):
        kw, kb = jax.random.split(k)
        bound = float(fan_in) ** -0.5
        w = jax.random.uniform(kw, (fan_in, fan_out), jnp.float32, -bound, bound)
        b = (jax.random.uniform(kb, (1, fan_out), jnp.float32, -bound, bound)
             if with_bias else None)
        return w, b

    k1, k2, k3 = jax.random.split(key, 3)
    w1, _ = linear(k1, input_size, H1, with_bias=False)   # bias cancelled by BN1
    w2, _ = linear(k2, H1, H2, with_bias=False)           # bias cancelled by BN2
    w3, b3 = linear(k3, H2, output_size, with_bias=True)

    w3p = jnp.zeros((H2, out_pad), jnp.float32).at[:, :output_size].set(w3)
    b3p = jnp.zeros((1, out_pad), jnp.float32).at[:, :output_size].set(b3)

    # Packed param vector: [gamma1(128) | beta1(128) | gamma2(256) | beta2(256) | b3(out_pad)]
    p = jnp.concatenate([
        jnp.ones((1, H1), jnp.float32), jnp.zeros((1, H1), jnp.float32),
        jnp.ones((1, H2), jnp.float32), jnp.zeros((1, H2), jnp.float32),
        b3p,
    ], axis=1)

    return {
        "w1": w1.astype(jnp.bfloat16),
        "w2": w2.astype(jnp.bfloat16),
        "w3": w3p.astype(jnp.bfloat16),
        "p": p,
    }


def decoder_reference(x, params, output_size):
    """Pure-JAX reference with identical numerics (bf16 matmul operands, f32
    accumulation, folded training-mode BN, clamped single-pass variance)."""
    bf16, f32 = jnp.bfloat16, jnp.float32
    p = params["p"]

    def bn_fold(h, gamma, beta):
        mean = jnp.mean(h, axis=0, keepdims=True)
        var = jnp.maximum(jnp.mean(h * h, axis=0, keepdims=True) - mean * mean, 0.0)
        scale = gamma * jax.lax.rsqrt(var + BN_EPS)
        return h * scale + (beta - mean * scale)

    h = jnp.dot(x.astype(bf16), params["w1"], preferred_element_type=f32)
    h = jnp.maximum(bn_fold(h, p[:, 0:H1], p[:, H1:2 * H1]), 0.0)
    h = jnp.dot(h.astype(bf16), params["w2"], preferred_element_type=f32)
    off = 2 * H1
    h = jnp.maximum(bn_fold(h, p[:, off:off + H2], p[:, off + H2:off + 2 * H2]), 0.0)
    out = jnp.dot(h.astype(bf16), params["w3"], preferred_element_type=f32)
    out = out + p[:, 2 * H1 + 2 * H2:]
    return out[:, :output_size]


if __name__ == "__main__":
    input_size, output_size, batch = 32, 64, 8

    key = jax.random.PRNGKey(0)
    kx, kp = jax.random.split(key)
    x = jax.random.normal(kx, (batch, input_size), jnp.float32)
    params = init_decoder_params(kp, input_size, output_size)

    out = decoder_forward(x, params, output_size)
    out = jax.block_until_ready(out)

    ref = decoder_reference(x, params, output_size)
    assert out.shape == (batch, output_size)
    assert jnp.allclose(out, ref, atol=2e-3, rtol=2e-3), "mismatch vs reference"

    # TODO(synk): BatchNorm1d running_mean/running_var buffer updates (training-time
    # side effect) are not emitted; they do not affect the forward output.
    print("KERNEL_OK")
</pallas_src>

<mosaic_0001>
module attributes {stable_mosaic.version = 11 : i64} {
  func.func @_decoder_kernel(%arg0: memref<8x32xf32, #tpu.memory_space<vmem>>, %arg1: memref<32x128xbf16, #tpu.memory_space<vmem>>, %arg2: memref<128x256xbf16, #tpu.memory_space<any>>, %arg3: memref<256x128xbf16, #tpu.memory_space<any>>, %arg4: memref<1x896xf32, #tpu.memory_space<vmem>>, %arg5: memref<8x128xf32, #tpu.memory_space<vmem>>, %arg6: memref<128x256xbf16, #tpu.memory_space<vmem>>, %arg7: memref<256x128xbf16, #tpu.memory_space<vmem>>, %arg8: memref<2x!tpu.dma_semaphore, #tpu.memory_space<semaphore_mem>>) attributes {dimension_semantics = [], scalar_prefetch = 0 : i64, scratch_operands = 3 : i64, tpu.core_type = #tpu.core_type<tc>} {
    %c0_i32 = arith.constant 0 : i32
    %0 = tpu.memref_slice %arg8[%c0_i32] : memref<2x!tpu.dma_semaphore, #tpu.memory_space<semaphore_mem>> -> memref<1x!tpu.dma_semaphore, #tpu.memory_space<semaphore_mem>>
    %1 = tpu.memref_squeeze %0 : memref<1x!tpu.dma_semaphore, #tpu.memory_space<semaphore_mem>> -> memref<!tpu.dma_semaphore, #tpu.memory_space<semaphore_mem>>
    tpu.enqueue_dma source(%arg2 : memref<128x256xbf16, #tpu.memory_space<any>>) target(%arg6 : memref<128x256xbf16, #tpu.memory_space<vmem>>) target_semaphore(%1 : memref<!tpu.dma_semaphore, #tpu.memory_space<semaphore_mem>>)
    %c1_i32 = arith.constant 1 : i32
    %2 = tpu.memref_slice %arg8[%c1_i32] : memref<2x!tpu.dma_semaphore, #tpu.memory_space<semaphore_mem>> -> memref<1x!tpu.dma_semaphore, #tpu.memory_space<semaphore_mem>>
    %3 = tpu.memref_squeeze %2 : memref<1x!tpu.dma_semaphore, #tpu.memory_space<semaphore_mem>> -> memref<!tpu.dma_semaphore, #tpu.memory_space<semaphore_mem>>
    tpu.enqueue_dma source(%arg3 : memref<256x128xbf16, #tpu.memory_space<any>>) target(%arg7 : memref<256x128xbf16, #tpu.memory_space<vmem>>) target_semaphore(%3 : memref<!tpu.dma_semaphore, #tpu.memory_space<semaphore_mem>>)
    %c0 = arith.constant 0 : index
    %c0_0 = arith.constant 0 : index
    %4 = vector.load %arg0[%c0, %c0_0] : memref<8x32xf32, #tpu.memory_space<vmem>>, vector<8x32xf32>
    %5 = arith.truncf %4 : vector<8x32xf32> to vector<8x32xbf16>
    %c0_1 = arith.constant 0 : index
    %c0_2 = arith.constant 0 : index
    %6 = vector.load %arg1[%c0_1, %c0_2] : memref<32x128xbf16, #tpu.memory_space<vmem>>, vector<32x128xbf16>
    %cst = arith.constant dense<0.000000e+00> : vector<8x128xf32>
    %7 = tpu.matmul %5, %6, %cst {dimension_numbers = #tpu.dot_dimension_numbers<[1], [0], [0], [1], [0, 0, 1, 1], [], []>} : vector<8x32xbf16>, vector<32x128xbf16>, vector<8x128xf32> -> vector<8x128xf32>
    %cst_3 = arith.constant dense<0.000000e+00> : vector<128xf32>
    %8 = vector.multi_reduction <add>, %7, %cst_3 [0] : vector<8x128xf32> to vector<128xf32>
    %9 = vector.shape_cast %8 : vector<128xf32> to vector<1x128xf32>
    %cst_4 = arith.constant 8.000000e+00 : f32
    %10 = vector.broadcast %cst_4 : f32 to vector<1x128xf32>
    %11 = arith.divf %9, %10 : vector<1x128xf32>
    %12 = arith.mulf %7, %7 : vector<8x128xf32>
    %cst_5 = arith.constant dense<0.000000e+00> : vector<128xf32>
    %13 = vector.multi_reduction <add>, %12, %cst_5 [0] : vector<8x128xf32> to vector<128xf32>
    %14 = vector.shape_cast %13 : vector<128xf32> to vector<1x128xf32>
    %cst_6 = arith.constant 8.000000e+00 : f32
    %15 = vector.broadcast %cst_6 : f32 to vector<1x128xf32>
    %16 = arith.divf %14, %15 : vector<1x128xf32>
    %17 = arith.mulf %11, %11 : vector<1x128xf32>
    %18 = arith.subf %16, %17 : vector<1x128xf32>
    %cst_7 = arith.constant 0.000000e+00 : f32
    %19 = vector.broadcast %cst_7 : f32 to vector<1x128xf32>
    %20 = arith.maximumf %18, %19 : vector<1x128xf32>
    %c0_8 = arith.constant 0 : index
    %c0_9 = arith.constant 0 : index
    %21 = vector.load %arg4[%c0_8, %c0_9] : memref<1x896xf32, #tpu.memory_space<vmem>>, vector<1x128xf32>
    %c0_10 = arith.constant 0 : index
    %c128 = arith.constant 128 : index
    %22 = vector.load %arg4[%c0_10, %c128] : memref<1x896xf32, #tpu.memory_space<vmem>>, vector<1x128xf32>
    %cst_11 = arith.constant 9.99999974E-6 : f32
    %23 = vector.broadcast %cst_11 : f32 to vector<1x128xf32>
    %24 = arith.addf %20, %23 : vector<1x128xf32>
    %25 = math.rsqrt %24 : vector<1x128xf32>
    %26 = arith.mulf %21, %25 : vector<1x128xf32>
    %27 = vector.broadcast %26 : vector<1x128xf32> to vector<8x128xf32>
    %28 = arith.mulf %7, %27 : vector<8x128xf32>
    %29 = arith.mulf %11, %26 : vector<1x128xf32>
    %30 = arith.subf %22, %29 : vector<1x128xf32>
    %31 = vector.broadcast %30 : vector<1x128xf32> to vector<8x128xf32>
    %32 = arith.addf %28, %31 : vector<8x128xf32>
    %cst_12 = arith.constant 0.000000e+00 : f32
    %33 = vector.broadcast %cst_12 : f32 to vector<8x128xf32>
    %34 = arith.maximumf %32, %33 : vector<8x128xf32>
    %c0_i32_13 = arith.constant 0 : i32
    %35 = tpu.memref_slice %arg8[%c0_i32_13] : memref<2x!tpu.dma_semaphore, #tpu.memory_space<semaphore_mem>> -> memref<1x!tpu.dma_semaphore, #tpu.memory_space<semaphore_mem>>
    %36 = tpu.memref_squeeze %35 : memref<1x!tpu.dma_semaphore, #tpu.memory_space<semaphore_mem>> -> memref<!tpu.dma_semaphore, #tpu.memory_space<semaphore_mem>>
    tpu.wait_dma2 semaphore(%36 : memref<!tpu.dma_semaphore, #tpu.memory_space<semaphore_mem>>) src(%arg2 : memref<128x256xbf16, #tpu.memory_space<any>>) dst(%arg6 : memref<128x256xbf16, #tpu.memory_space<vmem>>)
    %37 = arith.truncf %34 : vector<8x128xf32> to vector<8x128xbf16>
    %c0_14 = arith.constant 0 : index
    %c0_15 = arith.constant 0 : index
    %38 = vector.load %arg6[%c0_14, %c0_15] : memref<128x256xbf16, #tpu.memory_space<vmem>>, vector<128x256xbf16>
    %cst_16 = arith.constant dense<0.000000e+00> : vector<8x256xf32>
    %39 = tpu.matmul %37, %38, %cst_16 {dimension_numbers = #tpu.dot_dimension_numbers<[1], [0], [0], [1], [0, 0, 1, 1], [], []>} : vector<8x128xbf16>, vector<128x256xbf16>, vector<8x256xf32> -> vector<8x256xf32>
    %cst_17 = arith.constant dense<0.000000e+00> : vector<256xf32>
    %40 = vector.multi_reduction <add>, %39, %cst_17 [0] : vector<8x256xf32> to vector<256xf32>
    %41 = vector.shape_cast %40 : vector<256xf32> to vector<1x256xf32>
    %cst_18 = arith.constant 8.000000e+00 : f32
    %42 = vector.broadcast %cst_18 : f32 to vector<1x256xf32>
    %43 = arith.divf %41, %42 : vector<1x256xf32>
    %44 = arith.mulf %39, %39 : vector<8x256xf32>
    %cst_19 = arith.constant dense<0.000000e+00> : vector<256xf32>
    %45 = vector.multi_reduction <add>, %44, %cst_19 [0] : vector<8x256xf32> to vector<256xf32>
    %46 = vector.shape_cast %45 : vector<256xf32> to vector<1x256xf32>
    %cst_20 = arith.constant 8.000000e+00 : f32
    %47 = vector.broadcast %cst_20 : f32 to vector<1x256xf32>
    %48 = arith.divf %46, %47 : vector<1x256xf32>
    %49 = arith.mulf %43, %43 : vector<1x256xf32>
    %50 = arith.subf %48, %49 : vector<1x256xf32>
    %cst_21 = arith.constant 0.000000e+00 : f32
    %51 = vector.broadcast %cst_21 : f32 to vector<1x256xf32>
    %52 = arith.maximumf %50, %51 : vector<1x256xf32>
    %c0_22 = arith.constant 0 : index
    %c256 = arith.constant 256 : index
    %53 = vector.load %arg4[%c0_22, %c256] : memref<1x896xf32, #tpu.memory_space<vmem>>, vector<1x256xf32>
    %c0_23 = arith.constant 0 : index
    %c512 = arith.constant 512 : index
    %54 = vector.load %arg4[%c0_23, %c512] : memref<1x896xf32, #tpu.memory_space<vmem>>, vector<1x256xf32>
    %cst_24 = arith.constant 9.99999974E-6 : f32
    %55 = vector.broadcast %cst_24 : f32 to vector<1x256xf32>
    %56 = arith.addf %52, %55 : vector<1x256xf32>
    %57 = math.rsqrt %56 : vector<1x256xf32>
    %58 = arith.mulf %53, %57 : vector<1x256xf32>
    %59 = vector.broadcast %58 : vector<1x256xf32> to vector<8x256xf32>
    %60 = arith.mulf %39, %59 : vector<8x256xf32>
    %61 = arith.mulf %43, %58 : vector<1x256xf32>
    %62 = arith.subf %54, %61 : vector<1x256xf32>
    %63 = vector.broadcast %62 : vector<1x256xf32> to vector<8x256xf32>
    %64 = arith.addf %60, %63 : vector<8x256xf32>
    %cst_25 = arith.constant 0.000000e+00 : f32
    %65 = vector.broadcast %cst_25 : f32 to vector<8x256xf32>
    %66 = arith.maximumf %64, %65 : vector<8x256xf32>
    %c1_i32_26 = arith.constant 1 : i32
    %67 = tpu.memref_slice %arg8[%c1_i32_26] : memref<2x!tpu.dma_semaphore, #tpu.memory_space<semaphore_mem>> -> memref<1x!tpu.dma_semaphore, #tpu.memory_space<semaphore_mem>>
    %68 = tpu.memref_squeeze %67 : memref<1x!tpu.dma_semaphore, #tpu.memory_space<semaphore_mem>> -> memref<!tpu.dma_semaphore, #tpu.memory_space<semaphore_mem>>
    tpu.wait_dma2 semaphore(%68 : memref<!tpu.dma_semaphore, #tpu.memory_space<semaphore_mem>>) src(%arg3 : memref<256x128xbf16, #tpu.memory_space<any>>) dst(%arg7 : memref<256x128xbf16, #tpu.memory_space<vmem>>)
    %69 = arith.truncf %66 : vector<8x256xf32> to vector<8x256xbf16>
    %c0_27 = arith.constant 0 : index
    %c0_28 = arith.constant 0 : index
    %70 = vector.load %arg7[%c0_27, %c0_28] : memref<256x128xbf16, #tpu.memory_space<vmem>>, vector<256x128xbf16>
    %cst_29 = arith.constant dense<0.000000e+00> : vector<8x128xf32>
    %71 = tpu.matmul %69, %70, %cst_29 {dimension_numbers = #tpu.dot_dimension_numbers<[1], [0], [0], [1], [0, 0, 1, 1], [], []>} : vector<8x256xbf16>, vector<256x128xbf16>, vector<8x128xf32> -> vector<8x128xf32>
    %c0_30 = arith.constant 0 : index
    %c768 = arith.constant 768 : index
    %72 = vector.load %arg4[%c0_30, %c768] : memref<1x896xf32, #tpu.memory_space<vmem>>, vector<1x128xf32>
    %73 = vector.broadcast %72 : vector<1x128xf32> to vector<8x128xf32>
    %74 = arith.addf %71, %73 : vector<8x128xf32>
    %c0_31 = arith.constant 0 : index
    %c0_32 = arith.constant 0 : index
    %75 = vector.load %arg5[%c0_31, %c0_32] : memref<8x128xf32, #tpu.memory_space<vmem>>, vector<8x128xf32>
    tpu.vector_store %arg5[%c0_31, %c0_32], %74 {strides = array<i32>} : memref<8x128xf32, #tpu.memory_space<vmem>>, vector<8x128xf32>,
    return
  }
}

</mosaic_0001>

<llo_original>
// kernel: tpu_custom_call.1
$region0: #{tpu_custom_call.1}
  #allocation0 [shape = 'u32[]', space=smem, size = 0x4, offset = 0x4, fixed_abs, tag = 'smem constant byte address 0x4 - core index']
  #allocation1 [shape = 'u32[144,128]{1,0:T(1,128)}', space=vmem, size = 0x12000, scoped, tag = 'internal scratch']
  #allocation2 [shape = 'bf16[128,256]{1,0:T(8,128)(2,1)}', space=vmem, size = 0x10000, scoped, tag = 'scratch operand']
  #allocation3 [shape = 'bf16[256,128]{1,0:T(8,128)(2,1)}', space=vmem, size = 0x10000, scoped, tag = 'scratch operand']
  #allocation4 [shape = 's32[2]{0}', space=sflag, size = 0x8, scoped, tag = 'scratch operand']
  #allocation11 [shape = 's32[]', space=sflag, size = 0x4, offset = 0, fixed_abs, tag = 'sflag constant byte address 0x0 - dummy sync flag']
  #allocation12 [shape = 's32[]', space=sflag, size = 0x4, offset = 0, fixed_abs, tag = 'sflag constant byte address 0x0 - dummy sync flag']
  #allocation13 [shape = 'u32[]', space=smem, size = 0x4, offset = 0x44, fixed_abs, tag = 'smem constant byte address 0x44 - assertion arg 0']
  #allocation14 [shape = 'u32[]', space=smem, size = 0x4, offset = 0x48, fixed_abs, tag = 'smem constant byte address 0x48 - assertion arg 1']
  #allocation15 [shape = 's32[]', space=sflag, size = 0x4, offset = 0, fixed_abs, tag = 'sflag constant byte address 0x0 - dummy sync flag']
  #allocation16 [shape = 's32[]', space=sflag, size = 0x4, offset = 0, fixed_abs, tag = 'sflag constant byte address 0x0 - dummy sync flag']
  %s0 = inlined_call_operand.hbm [shape: f32[8,32], index: 0, kind: input, shape index: {}]
  %s1 = inlined_call_operand.hbm [shape: bf16[32,128], index: 1, kind: input, shape index: {}]
  %s2 = inlined_call_operand.hbm [shape: bf16[128,256], index: 2, kind: input, shape index: {}]
  %s3 = inlined_call_operand.hbm [shape: bf16[256,128], index: 3, kind: input, shape index: {}]
  %s4 = inlined_call_operand.vmem [shape: f32[1,896], index: 4, kind: input, shape index: {}]
  %s5 = inlined_call_operand.hbm [shape: f32[8,128], index: 5, kind: output, shape index: {}]
  %s6 = sld [smem:[#allocation0]]
  $region38: #{tpu_custom_call.1} parent=0
    _
  %s8 = ssub.s32 1, %s6
  %s9 = scalar_select 0, %s8, %s6
  $region1: #{tpu_custom_call.1} parent=0
    #allocation5 [shape = 'u8[4096]{0}', space=vmem, size = 0x1000, scoped, tag = 'input window, operand 0, single buffered']
    #allocation6 [shape = 's32[1]{0}', space=sflag, size = 0x4, scoped, tag = 'scoped memory for tpu_custom_call.1']
    #allocation7 [shape = 's32[1]{0}', space=sflag, size = 0x4, scoped, tag = 'scoped memory for tpu_custom_call.1']
    #allocation8 [shape = 'u8[8192]{0}', space=vmem, size = 0x2000, scoped, tag = 'input window, operand 1, single buffered']
    #allocation9 [shape = 's32[1]{0}', space=sflag, size = 0x4, scoped, tag = 'scoped memory for tpu_custom_call.1']
    #allocation10 [shape = 'u8[4096]{0}', space=vmem, size = 0x1000, scoped, tag = 'output window, operand 0, single buffered']
    %10 = vsyncpa [#allocation6], 0
    %11 = vsyncpa [#allocation9], 0
    %12 = vsyncpa [#allocation7], 0
    // Predicated region
    $region2: #{tpu_custom_call.1} parent=1 // pred_check
      _
    $region3: #{tpu_custom_call.1} parent=1 // pred_check_branch
      %14 = sbr.rel (0) target = $region5
    $region4: #{tpu_custom_call.1} parent=1 // pred_region
      %s16 = ssub.s32 128, 128
      %17 = vsyncadd [#allocation6], %s16
      %s19 = sshll.u32 [#allocation5], 4
      %s20 = int_to_ptr.vmem [resolvable:$true] %s19
      %22 = dma.hbm_to_vmem [thread:$0]  %s0, 128, %s20, [#allocation6]
    $region5: #{tpu_custom_call.1} parent=1 // pred_fallthru
      _
    // Predicated region
    $region6: #{tpu_custom_call.1} parent=1 // pred_check
      _
    $region7: #{tpu_custom_call.1} parent=1 // pred_check_branch
      %24 = sbr.rel (0) target = $region9
    $region8: #{tpu_custom_call.1} parent=1 // pred_region
      %s26 = ssub.s32 256, 256
      %27 = vsyncadd [#allocation9], %s26
      %s28 = sshll.u32 [#allocation8], 4
      %s29 = int_to_ptr.vmem [resolvable:$true] %s28
      %34 = dma.hbm_to_vmem [thread:$0]  %s1, 256, %s29, [#allocation9], 64, 64, 4
    $region9: #{tpu_custom_call.1} parent=1 // pred_fallthru
      _
    // Predicated region
    $region10: #{tpu_custom_call.1} parent=1 // pred_check
      _
    $region11: #{tpu_custom_call.1} parent=1 // pred_check_branch
      %36 = sbr.rel (0) target = $region13
    $region12: #{tpu_custom_call.1} parent=1 // pred_region
      _
    $region13: #{tpu_custom_call.1} parent=1 // pred_fallthru
      _
    // Predicated region
    $region14: #{tpu_custom_call.1} parent=1 // pred_check
      _
    $region15: #{tpu_custom_call.1} parent=1 // pred_check_branch
      %38 = sbr.rel (0) target = $region17
    $region16: #{tpu_custom_call.1} parent=1 // pred_region
      %39 = dma.done [#allocation6], 128
    $region17: #{tpu_custom_call.1} parent=1 // pred_fallthru
      _
    // Predicated region
    $region18: #{tpu_custom_call.1} parent=1 // pred_check
      _
    $region19: #{tpu_custom_call.1} parent=1 // pred_check_branch
      %41 = sbr.rel (0) target = $region21
    $region20: #{tpu_custom_call.1} parent=1 // pred_region
      %42 = dma.done [#allocation9], 256
    $region21: #{tpu_custom_call.1} parent=1 // pred_fallthru
      _
    // Predicated region
    $region22: #{tpu_custom_call.1} parent=1 // pred_check
      _
    $region23: #{tpu_custom_call.1} parent=1 // pred_check_branch
      %45 = sbr.rel target = $region25
    $region24: #{tpu_custom_call.1} parent=1 // pred_region
      %46 = sst [smem:[#allocation13]] [#allocation12]
      %47 = sst [smem:[#allocation14]] [#allocation11]
    $region25: #{tpu_custom_call.1} parent=1 // pred_fallthru
      _
    %49 = shalt.err (0)
    %s51 = sshll.u32 [#allocation2], 4
    %s52 = int_to_ptr.vmem [resolvable:$true] %s51
    %54 = dma.hbm_to_vmem [thread:$0]  %s2, 2048, %s52, [#allocation4]
    %s55 = scalar_lea.sflag [#allocation4], 1
    // Predicated region
    $region26: #{tpu_custom_call.1} parent=1 // pred_check
      _
    $region27: #{tpu_custom_call.1} parent=1 // pred_check_branch
      %57 = sbr.rel target = $region29
    $region28: #{tpu_custom_call.1} parent=1 // pred_region
      %58 = sst [smem:[#allocation13]] [#allocation16]
      %59 = sst [smem:[#allocation14]] [#allocation15]
    $region29: #{tpu_custom_call.1} parent=1 // pred_fallthru
      _
    %61 = shalt.err (0)
    %s63 = sshll.u32 [#allocation3], 4
    %s64 = int_to_ptr.vmem [resolvable:$true] %s63
    %66 = dma.hbm_to_vmem [thread:$0]  %s3, 2048, %s64, %s55
    %v67 = vld [vmem:[#allocation5] sm:$0xff]
    %v68 = vpack.c.bf16 %v67, %v67
    %v69 = vld [vmem:[#allocation8] sm:$0xf]
    %v70 = vld [vmem:[#allocation8 + $0x4] sm:$0xf]
    %v71 = vld [vmem:[#allocation8 + $0x8] sm:$0xf]
    %v72 = vld [vmem:[#allocation8 + $0xc] sm:$0xf]
    %v77 = vunpack.c.l.b16 %v69
    %v78 = vunpack.c.l.b16 %v70
    %v79 = vunpack.c.l.b16 %v71
    %v80 = vunpack.c.l.b16 %v72
    %v81 = vpack.c.b16 %v78, %v77
    %v82 = vpack.c.b16 %v80, %v79
    %vm85 = vcmask 261120
    %v87 = vsel %vm85, %v68, 0
    %89 = vmatprep.subr.bf16.mxu0 0
    %90 = vmatpush1.bf16.msra.mxu0 0
    %91 = vmatprep.subr.bf16.mxu0 0
    %92 = vmatpush1.bf16.msra.mxu0 0
    %93 = vmatprep.subr.bf16.mxu0 0
    %94 = vmatpush1.bf16.msra.mxu0 0
    %95 = vmatprep.subr.bf16.mxu0 0
    %96 = vmatpush1.bf16.msra.mxu0 0
    %97 = vmatprep.subr.bf16.mxu0 0
    %98 = vmatpush1.bf16.msra.mxu0 0
    %99 = vmatprep.subr.bf16.mxu0 0
    %100 = vmatpush1.bf16.msra.mxu0 0
    %101 = vmatprep.subr.bf16.mxu0 0
    %102 = vmatpush1.bf16.msra.mxu0 %v82
    %103 = vmatprep.subr.bf16.mxu0 0
    %104 = vmatpush1.bf16.msra.mxu0 %v81
    %105 = vmatprep.subr.bf16.mxu0 0
    %106 = vmatpush2.bf16.msra.mxu0 0
    %107 = vmatprep.subr.bf16.mxu0 0
    %108 = vmatpush2.bf16.msra.mxu0 0
    %109 = vmatprep.subr.bf16.mxu0 0
    %110 = vmatpush2.bf16.msra.mxu0 0
    %111 = vmatprep.subr.bf16.mxu0 0
    %112 = vmatpush2.bf16.msra.mxu0 0
    %113 = vmatprep.subr.bf16.mxu0 0
    %114 = vmatpush2.bf16.msra.mxu0 0
    %115 = vmatprep.subr.bf16.mxu0 0
    %116 = vmatpush2.bf16.msra.mxu0 0
    %117 = vmatprep.subr.bf16.mxu0 0
    %118 = vmatpush2.bf16.msra.mxu0 0
    %119 = vmatprep.subr.bf16.mxu0 0
    %120 = vmatpush2.bf16.msra.mxu0 0
    %121 = vmatprep.mubr.bf16.mxu0 0
    %122 = vmatmul.mubr.bf16.gmra.mxu0 %v87
    %v123 = vpop.f32.mrf.mxu0
    %v124 = vadd.f32 0.0, %v123
    %v125 = vpop.f32.mrf.mxu0
    %v126 = vpop.f32.mrf.mxu0
    %v127 = vpop.f32.mrf.mxu0
    %128 = vdwg.mxu0
    %v129 = vrot.slane %v124, 4
    %v130 = vadd.f32 %v124, %v129
    %v131 = vrot.slane %v130, 2
    %v132 = vadd.f32 %v130, %v131
    %v133 = vrot.slane %v132, 1
    %v134 = vadd.f32 %v132, %v133
    %v135 = vrcp.pop 8.0
    %v136 = vmul.f32 %v134, %v135
    %v137 = vmul.f32 %v124, %v124
    %v138 = vrot.slane %v137, 4
    %v139 = vadd.f32 %v137, %v138
    %v140 = vrot.slane %v139, 2
    %v141 = vadd.f32 %v139, %v140
    %v142 = vrot.slane %v141, 1
    %v143 = vadd.f32 %v141, %v142
    %v144 = vmul.f32 %v143, %v135
    %v145 = vmul.f32 %v136, %v136
    %v146 = vsub.f32 %v144, %v145
    %v147 = vmax.f32 %v146, 0.0
    %v148 = vld [vmem:[%s4] sm:$0x1]
    %v149 = vld [vmem:[%s4 + $0x1] sm:$0x1]
    %v150 = vadd.f32 %v147, 1e-05
    %v151 = vrsqrt.pop %v150
    %v152 = vmul.f32 %v148, %v151
    %v154 = vlaneseq
    %v155 = vshrl.u32 %v154, 7
    %v156 = vsub.s32 0, %v155
    %v157 = vrot.slane %v152, %v156
    %v159 = vmul.f32 %v124, %v157
    %v160 = vmul.f32 %v136, %v152
    %v161 = vsub.f32 %v149, %v160
    %v163 = vlaneseq
    %v164 = vshrl.u32 %v163, 7
    %v165 = vsub.s32 0, %v164
    %v166 = vrot.slane %v161, %v165
    %v168 = vadd.f32 %v159, %v166
    %v169 = vmax.f32 %v168, 0.0
    %s170 = smul.u32 4, 16
    %s171 = smul.u32 %s170, 2
    %s172 = sshll.u32 %s171, 4
    %173 = dma.done [#allocation4], %s172
    %v174 = vpack.c.bf16 %v169, %v169
    %v175 = vld [vmem:[#allocation2] sm:$0xff]
    %v176 = vld [vmem:[#allocation2 + $0x8] sm:$0xff]
    %v177 = vld [vmem:[#allocation2 + $0x10] sm:$0xff]
    %v178 = vld [vmem:[#allocation2 + $0x18] sm:$0xff]
    %v179 = vld [vmem:[#allocation2 + $0x20] sm:$0xff]
    %v180 = vld [vmem:[#allocation2 + $0x28] sm:$0xff]
    %v181 = vld [vmem:[#allocation2 + $0x30] sm:$0xff]
    %v182 = vld [vmem:[#allocation2 + $0x38] sm:$0xff]
    %v183 = vld [vmem:[#allocation2 + $0x40] sm:$0xff]
    %v184 = vld [vmem:[#allocation2 + $0x48] sm:$0xff]
    %v185 = vld [vmem:[#allocation2 + $0x50] sm:$0xff]
    %v186 = vld [vmem:[#allocation2 + $0x58] sm:$0xff]
    %v187 = vld [vmem:[#allocation2 + $0x60] sm:$0xff]
    %v188 = vld [vmem:[#allocation2 + $0x68] sm:$0xff]
    %v189 = vld [vmem:[#allocation2 + $0x70] sm:$0xff]
    %v190 = vld [vmem:[#allocation2 + $0x78] sm:$0xff]
    %v207 = vunpack.c.l.b16 %v175
    %v208 = vunpack.c.h.b16 %v175
    %v209 = vunpack.c.l.b16 %v176
    %v210 = vunpack.c.h.b16 %v176
    %v211 = vunpack.c.l.b16 %v177
    %v212 = vunpack.c.h.b16 %v177
    %v213 = vunpack.c.l.b16 %v178
    %v214 = vunpack.c.h.b16 %v178
    %v215 = vunpack.c.l.b16 %v179
    %v216 = vunpack.c.h.b16 %v179
    %v217 = vunpack.c.l.b16 %v180
    %v218 = vunpack.c.h.b16 %v180
    %v219 = vunpack.c.l.b16 %v181
    %v220 = vunpack.c.h.b16 %v181
    %v221 = vunpack.c.l.b16 %v182
    %v222 = vunpack.c.h.b16 %v182
    %v223 = vunpack.c.l.b16 %v183
    %v224 = vunpack.c.h.b16 %v183
    %v225 = vunpack.c.l.b16 %v184
    %v226 = vunpack.c.h.b16 %v184
    %v227 = vunpack.c.l.b16 %v185
    %v228 = vunpack.c.h.b16 %v185
    %v229 = vunpack.c.l.b16 %v186
    %v230 = vunpack.c.h.b16 %v186
    %v231 = vunpack.c.l.b16 %v187
    %v232 = vunpack.c.h.b16 %v187
    %v233 = vunpack.c.l.b16 %v188
    %v234 = vunpack.c.h.b16 %v188
    %v235 = vunpack.c.l.b16 %v189
    %v236 = vunpack.c.h.b16 %v189
    %v237 = vunpack.c.l.b16 %v190
    %v238 = vunpack.c.h.b16 %v190
    %v239 = vpack.c.b16 %v209, %v207
    %v240 = vpack.c.b16 %v210, %v208
    %v241 = vpack.c.b16 %v213, %v211
    %v242 = vpack.c.b16 %v214, %v212
    %v243 = vpack.c.b16 %v217, %v215
    %v244 = vpack.c.b16 %v218, %v216
    %v245 = vpack.c.b16 %v221, %v219
    %v246 = vpack.c.b16 %v222, %v220
    %v247 = vpack.c.b16 %v225, %v223
    %v248 = vpack.c.b16 %v226, %v224
    %v249 = vpack.c.b16 %v229, %v227
    %v250 = vpack.c.b16 %v230, %v228
    %v251 = vpack.c.b16 %v233, %v231
    %v252 = vpack.c.b16 %v234, %v232
    %v253 = vpack.c.b16 %v237, %v235
    %v254 = vpack.c.b16 %v238, %v236
    %271 = vmatprep.subr.bf16.mxu0 %v254
    %272 = vmatpush1.bf16.msra.mxu0 %v253
    %273 = vmatprep.subr.bf16.mxu0 %v252
    %274 = vmatpush1.bf16.msra.mxu0 %v251
    %275 = vmatprep.subr.bf16.mxu0 %v250
    %276 = vmatpush1.bf16.msra.mxu0 %v249
    %277 = vmatprep.subr.bf16.mxu0 %v248
    %278 = vmatpush1.bf16.msra.mxu0 %v247
    %279 = vmatprep.subr.bf16.mxu0 %v246
    %280 = vmatpush1.bf16.msra.mxu0 %v245
    %281 = vmatprep.subr.bf16.mxu0 %v244
    %282 = vmatpush1.bf16.msra.mxu0 %v243
    %283 = vmatprep.subr.bf16.mxu0 %v242
    %284 = vmatpush1.bf16.msra.mxu0 %v241
    %285 = vmatprep.subr.bf16.mxu0 %v240
    %286 = vmatpush1.bf16.msra.mxu0 %v239
    %287 = vmatprep.subr.bf16.mxu0 0
    %288 = vmatpush2.bf16.msra.mxu0 0
    %289 = vmatprep.subr.bf16.mxu0 0
    %290 = vmatpush2.bf16.msra.mxu0 0
    %291 = vmatprep.subr.bf16.mxu0 0
    %292 = vmatpush2.bf16.msra.mxu0 0
    %293 = vmatprep.subr.bf16.mxu0 0
    %294 = vmatpush2.bf16.msra.mxu0 0
    %295 = vmatprep.subr.bf16.mxu0 0
    %296 = vmatpush2.bf16.msra.mxu0 0
    %297 = vmatprep.subr.bf16.mxu0 0
    %298 = vmatpush2.bf16.msra.mxu0 0
    %299 = vmatprep.subr.bf16.mxu0 0
    %300 = vmatpush2.bf16.msra.mxu0 0
    %301 = vmatprep.subr.bf16.mxu0 0
    %302 = vmatpush2.bf16.msra.mxu0 0
    %303 = vmatprep.mubr.bf16.mxu0 0
    %304 = vmatmul.mubr.bf16.gmra.mxu0 %v174
    %v305 = vpop.f32.mrf.mxu0
    %v306 = vadd.f32 0.0, %v305
    %v307 = vpop.f32.mrf.mxu0
    %v308 = vadd.f32 0.0, %v307
    %v309 = vpop.f32.mrf.mxu0
    %v310 = vpop.f32.mrf.mxu0
    %311 = vdwg.mxu0
    %v312 = vrot.slane %v306, 4
    %v313 = vadd.f32 %v306, %v312
    %v314 = vrot.slane %v313, 2
    %v315 = vadd.f32 %v313, %v314
    %v316 = vrot.slane %v315, 1
    %v317 = vadd.f32 %v315, %v316
    %v318 = vrot.slane %v308, 4
    %v319 = vadd.f32 %v308, %v318
    %v320 = vrot.slane %v319, 2
    %v321 = vadd.f32 %v319, %v320
    %v322 = vrot.slane %v321, 1
    %v323 = vadd.f32 %v321, %v322
    %v324 = vmul.f32 %v317, %v135
    %v325 = vmul.f32 %v323, %v135
    %v326 = vmul.f32 %v306, %v306
    %v327 = vmul.f32 %v308, %v308
    %v328 = vrot.slane %v326, 4
    %v329 = vadd.f32 %v326, %v328
    %v330 = vrot.slane %v329, 2
    %v331 = vadd.f32 %v329, %v330
    %v332 = vrot.slane %v331, 1
    %v333 = vadd.f32 %v331, %v332
    %v334 = vrot.slane %v327, 4
    %v335 = vadd.f32 %v327, %v334
    %v336 = vrot.slane %v335, 2
    %v337 = vadd.f32 %v335, %v336
    %v338 = vrot.slane %v337, 1
    %v339 = vadd.f32 %v337, %v338
    %v340 = vmul.f32 %v333, %v135
    %v341 = vmul.f32 %v339, %v135
    %v342 = vmul.f32 %v324, %v324
    %v343 = vmul.f32 %v325, %v325
    %v344 = vsub.f32 %v340, %v342
    %v345 = vsub.f32 %v341, %v343
    %v346 = vmax.f32 %v344, 0.0
    %v347 = vmax.f32 %v345, 0.0
    %v348 = vld [vmem:[%s4 + $0x2] sm:$0x3]
    %v349 = vld [vmem:[%s4 + $0x4] sm:$0x3]
    %v350 = vadd.f32 %v346, 1e-05
    %v351 = vadd.f32 %v347, 1e-05
    %v352 = vrsqrt.pop %v350
    %v353 = vrsqrt.pop %v351
    %v356 = vcombine.low %v352, %v353
    %v358 = vunpack.c.l.s4 1966171168
    %v359 = vunpack.c.0.s8 %v358
    %v360 = vlaneseq
    %v361 = vshrl.u32 %v360, 7
    %v362 = vsub.s32 %v359, %v361
    %v363 = vrot.slane %v356, %v362
    %v365 = vunpack.c.l.s4 1966171168
    %v366 = vunpack.c.0.s8 %v365
    %v367 = vlaneseq
    %v368 = vshrl.u32 %v367, 7
    %v369 = vsub.s32 %v366, %v368
    %v370 = vrot.slane %v363, %v369
    %v372 = vmul.f32 %v348, %v370
    %v374 = vlaneseq
    %v375 = vshrl.u32 %v374, 7
    %v376 = vsub.s32 0, %v375
    %v377 = vrot.slane %v372, %v376
    %v378 = vlaneseq
    %v379 = vshrl.u32 %v378, 7
    %v380 = vsub.s32 1, %v379
    %v381 = vrot.slane %v372, %v380
    %v384 = vmul.f32 %v306, %v377
    %v385 = vmul.f32 %v308, %v381
    %v386 = vmul.f32 %v324, %v377
    %v387 = vmul.f32 %v325, %v381
    %v390 = vcombine.low %v386, %v387
    %v392 = vunpack.c.l.s4 1966171168
    %v393 = vunpack.c.0.s8 %v392
    %v394 = vlaneseq
    %v395 = vshrl.u32 %v394, 7
    %v396 = vsub.s32 %v393, %v395
    %v397 = vrot.slane %v390, %v396
    %v399 = vunpack.c.l.s4 1966171168
    %v400 = vunpack.c.0.s8 %v399
    %v401 = vlaneseq
    %v402 = vshrl.u32 %v401, 7
    %v403 = vsub.s32 %v400, %v402
    %v404 = vrot.slane %v397, %v403
    %v406 = vsub.f32 %v349, %v404
    %v408 = vlaneseq
    %v409 = vshrl.u32 %v408, 7
    %v410 = vsub.s32 0, %v409
    %v411 = vrot.slane %v406, %v410
    %v412 = vlaneseq
    %v413 = vshrl.u32 %v412, 7
    %v414 = vsub.s32 1, %v413
    %v415 = vrot.slane %v406, %v414
    %v418 = vadd.f32 %v384, %v411
    %v419 = vadd.f32 %v385, %v415
    %v420 = vmax.f32 %v418, 0.0
    %v421 = vmax.f32 %v419, 0.0
    %s422 = smul.u32 4, 32
    %s423 = smul.u32 %s422, 1
    %s424 = sshll.u32 %s423, 4
    %425 = dma.done %s55, %s424
    %v426 = vpack.c.bf16 %v420, %v420
    %v427 = vpack.c.bf16 %v421, %v421
    %v428 = vld [vmem:[#allocation3] sm:$0xf]
    %v429 = vld [vmem:[#allocation3 + $0x4] sm:$0xf]
    %v430 = vld [vmem:[#allocation3 + $0x8] sm:$0xf]
    %v431 = vld [vmem:[#allocation3 + $0xc] sm:$0xf]
    %v432 = vld [vmem:[#allocation3 + $0x10] sm:$0xf]
    %v433 = vld [vmem:[#allocation3 + $0x14] sm:$0xf]
    %v434 = vld [vmem:[#allocation3 + $0x18] sm:$0xf]
    %v435 = vld [vmem:[#allocation3 + $0x1c] sm:$0xf]
    %v436 = vld [vmem:[#allocation3 + $0x20] sm:$0xf]
    %v437 = vld [vmem:[#allocation3 + $0x24] sm:$0xf]
    %v438 = vld [vmem:[#allocation3 + $0x28] sm:$0xf]
    %v439 = vld [vmem:[#allocation3 + $0x2c] sm:$0xf]
    %v440 = vld [vmem:[#allocation3 + $0x30] sm:$0xf]
    %v441 = vld [vmem:[#allocation3 + $0x34] sm:$0xf]
    %v442 = vld [vmem:[#allocation3 + $0x38] sm:$0xf]
    %v443 = vld [vmem:[#allocation3 + $0x3c] sm:$0xf]
    %v444 = vld [vmem:[#allocation3 + $0x40] sm:$0xf]
    %v445 = vld [vmem:[#allocation3 + $0x44] sm:$0xf]
    %v446 = vld [vmem:[#allocation3 + $0x48] sm:$0xf]
    %v447 = vld [vmem:[#allocation3 + $0x4c] sm:$0xf]
    %v448 = vld [vmem:[#allocation3 + $0x50] sm:$0xf]
    %v449 = vld [vmem:[#allocation3 + $0x54] sm:$0xf]
    %v450 = vld [vmem:[#allocation3 + $0x58] sm:$0xf]
    %v451 = vld [vmem:[#allocation3 + $0x5c] sm:$0xf]
    %v452 = vld [vmem:[#allocation3 + $0x60] sm:$0xf]
    %v453 = vld [vmem:[#allocation3 + $0x64] sm:$0xf]
    %v454 = vld [vmem:[#allocation3 + $0x68] sm:$0xf]
    %v455 = vld [vmem:[#allocation3 + $0x6c] sm:$0xf]
    %v456 = vld [vmem:[#allocation3 + $0x70] sm:$0xf]
    %v457 = vld [vmem:[#allocation3 + $0x74] sm:$0xf]
    %v458 = vld [vmem:[#allocation3 + $0x78] sm:$0xf]
    %v459 = vld [vmem:[#allocation3 + $0x7c] sm:$0xf]
    %v460 = vld [vmem:[%s4 + $0x6] sm:$0x1]
    %v462 = vlaneseq
    %v463 = vshrl.u32 %v462, 7
    %v464 = vsub.s32 0, %v463
    %v465 = vrot.slane %v460, %v464
    %v499 = vunpack.c.l.b16 %v428
    %v500 = vunpack.c.l.b16 %v429
    %v501 = vunpack.c.l.b16 %v430
    %v502 = vunpack.c.l.b16 %v431
    %v503 = vunpack.c.l.b16 %v432
    %v504 = vunpack.c.l.b16 %v433
    %v505 = vunpack.c.l.b16 %v434
    %v506 = vunpack.c.l.b16 %v435
    %v507 = vunpack.c.l.b16 %v436
    %v508 = vunpack.c.l.b16 %v437
    %v509 = vunpack.c.l.b16 %v438
    %v510 = vunpack.c.l.b16 %v439
    %v511 = vunpack.c.l.b16 %v440
    %v512 = vunpack.c.l.b16 %v441
    %v513 = vunpack.c.l.b16 %v442
    %v514 = vunpack.c.l.b16 %v443
    %v515 = vunpack.c.l.b16 %v444
    %v516 = vunpack.c.l.b16 %v445
    %v517 = vunpack.c.l.b16 %v446
    %v518 = vunpack.c.l.b16 %v447
    %v519 = vunpack.c.l.b16 %v448
    %v520 = vunpack.c.l.b16 %v449
    %v521 = vunpack.c.l.b16 %v450
    %v522 = vunpack.c.l.b16 %v451
    %v523 = vunpack.c.l.b16 %v452
    %v524 = vunpack.c.l.b16 %v453
    %v525 = vunpack.c.l.b16 %v454
    %v526 = vunpack.c.l.b16 %v455
    %v527 = vunpack.c.l.b16 %v456
    %v528 = vunpack.c.l.b16 %v457
    %v529 = vunpack.c.l.b16 %v458
    %v530 = vunpack.c.l.b16 %v459
    %v531 = vpack.c.b16 %v500, %v499
    %v532 = vpack.c.b16 %v502, %v501
    %v533 = vpack.c.b16 %v504, %v503
    %v534 = vpack.c.b16 %v506, %v505
    %v535 = vpack.c.b16 %v508, %v507
    %v536 = vpack.c.b16 %v510, %v509
    %v537 = vpack.c.b16 %v512, %v511
    %v538 = vpack.c.b16 %v514, %v513
    %v539 = vpack.c.b16 %v516, %v515
    %v540 = vpack.c.b16 %v518, %v517
    %v541 = vpack.c.b16 %v520, %v519
    %v542 = vpack.c.b16 %v522, %v521
    %v543 = vpack.c.b16 %v524, %v523
    %v544 = vpack.c.b16 %v526, %v525
    %v545 = vpack.c.b16 %v528, %v527
    %v546 = vpack.c.b16 %v530, %v529
    %563 = vmatprep.subr.bf16.mxu0 0
    %564 = vmatpush1.bf16.msra.mxu0 %v538
    %565 = vmatprep.subr.bf16.mxu0 0
    %566 = vmatpush1.bf16.msra.mxu0 %v537
    %567 = vmatprep.subr.bf16.mxu0 0
    %568 = vmatpush1.bf16.msra.mxu0 %v536
    %569 = vmatprep.subr.bf16.mxu0 0
    %570 = vmatpush1.bf16.msra.mxu0 %v535
    %571 = vmatprep.subr.bf16.mxu0 0
    %572 = vmatpush1.bf16.msra.mxu0 %v534
    %573 = vmatprep.subr.bf16.mxu0 0
    %574 = vmatpush1.bf16.msra.mxu0 %v533
    %575 = vmatprep.subr.bf16.mxu0 0
    %576 = vmatpush1.bf16.msra.mxu0 %v532
    %577 = vmatprep.subr.bf16.mxu0 0
    %578 = vmatpush1.bf16.msra.mxu0 %v531
    %579 = vmatprep.subr.bf16.mxu0 0
    %580 = vmatpush2.bf16.msra.mxu0 %v546
    %581 = vmatprep.subr.bf16.mxu0 0
    %582 = vmatpush2.bf16.msra.mxu0 %v545
    %583 = vmatprep.subr.bf16.mxu0 0
    %584 = vmatpush2.bf16.msra.mxu0 %v544
    %585 = vmatprep.subr.bf16.mxu0 0
    %586 = vmatpush2.bf16.msra.mxu0 %v543
    %587 = vmatprep.subr.bf16.mxu0 0
    %588 = vmatpush2.bf16.msra.mxu0 %v542
    %589 = vmatprep.subr.bf16.mxu0 0
    %590 = vmatpush2.bf16.msra.mxu0 %v541
    %591 = vmatprep.subr.bf16.mxu0 0
    %592 = vmatpush2.bf16.msra.mxu0 %v540
    %593 = vmatprep.subr.bf16.mxu0 0
    %594 = vmatpush2.bf16.msra.mxu0 %v539
    %595 = vmatprep.mubr.bf16.mxu0 %v427
    %596 = vmatmul.mubr.bf16.gmra.mxu0 %v426
    %v597 = vpop.f32.mrf.mxu0
    %v598 = vadd.f32 %v465, %v597
    %v599 = vpop.f32.mrf.mxu0
    %v600 = vpop.f32.mrf.mxu0
    %v601 = vpop.f32.mrf.mxu0
    %602 = vdwg.mxu0
    %603 = vst [vmem:[#allocation10] sm:$0xff] %v598
    // Predicated region
    $region30: #{tpu_custom_call.1} parent=1 // pred_check
      _
    $region31: #{tpu_custom_call.1} parent=1 // pred_check_branch
      %605 = sbr.rel (0) target = $region33
    $region32: #{tpu_custom_call.1} parent=1 // pred_region
      %s607 = ssub.s32 128, 128
      %608 = vsyncadd [#allocation7], %s607
      %s610 = sshll.u32 [#allocation10], 4
      %s611 = int_to_ptr.vmem [resolvable:$true] %s610
      %613 = dma.vmem_to_hbm [thread:$0]  %s611, 128, %s5, [#allocation7]
    $region33: #{tpu_custom_call.1} parent=1 // pred_fallthru
      _
    // Predicated region
    $region34: #{tpu_custom_call.1} parent=1 // pred_check
      _
    $region35: #{tpu_custom_call.1} parent=1 // pred_check_branch
      %615 = sbr.rel (0) target = $region37
    $region36: #{tpu_custom_call.1} parent=1 // pred_region
      %616 = dma.done [#allocation7], 128
    $region37: #{tpu_custom_call.1} parent=1 // pred_fallthru
      _
    %617 = vsyncpa [#allocation6], 1
    %618 = vsyncpa [#allocation9], 1
    %619 = vsyncpa [#allocation7], 1
  %620 = vsyncmov [#allocation4]
  %s621 = vpop.sfrf %620
  %p622 = scmp.eq.s32.totalorder %s621, 0
  %p623 = pneg %p622
  %625 = shalt.err (%p623)
  %s626 = scalar_lea.sflag [#allocation4], 1
  %627 = vsyncmov %s626
  %s628 = vpop.sfrf %627
  %p629 = scmp.eq.s32.totalorder %s628, 0
  %p630 = pneg %p629
  %632 = shalt.err (%p630)

</llo_original>
